<compile_context>
chip_gen: v5e
topology: v5e:2x2
jax: 0.10.0
libtpu: 0.0.40
codegen_flags: <defaults>
</compile_context>

<pallas_src>
import numpy as np
import jax
import jax.numpy as jnp
from jax.experimental import pallas as pl
from jax.experimental.pallas import tpu as pltpu

KERNEL_SIZE = 9          # kernel_var=None, kernel_type='mean' -> [9, 9] ones filter
EPS = 1e-5               # default eps of NCC_Loss


def _pick_batch_block(B, H, W, in_itemsize, vmem_budget_bytes=16 * 1024 * 1024):
    """Largest divisor of B whose per-step VMEM footprint fits the budget
    (conservative so the same choice also fits v7x's smaller VMEM and the
    default scoped-VMEM limit on v5e/v6e)."""
    best = 1
    for bb in range(1, B + 1):
        if B % bb:
            continue
        need = (
            2 * 2 * bb * H * W * in_itemsize   # I and J input blocks, double-buffered
            + bb * H * W * 4                   # f32 cc accumulator scratch
            + 4 * 5 * bb * H * W * 4           # fused 5-channel stack + matmul temps (f32)
            + 5 * bb * H * H * 4               # broadcast band matrix for the H stage
            + 2 * (H * H + W * W) * 4          # cached band matrices + iota temps
        )
        if need <= vmem_budget_bytes:
            best = bb
    return best


def ncc_loss_pallas(prediction, target, kernel_size=KERNEL_SIZE, eps=EPS,
                    batch_block=None):
    """-sqrt(mean(cc)) with a kernel_size x kernel_size zero-padded mean filter."""
    B, C, H, W = prediction.shape
    assert C == 1, "PyTorch conv2d with a [1,1,k,k] filter requires in_channels == 1"
    assert prediction.shape == target.shape

    radius = kernel_size // 2
    win = float(kernel_size * kernel_size)          # torch.sum(filt) == 81
    inv_win = 1.0 / win
    count = float(B * C * H * W)                    # elements in cc for the mean

    if batch_block is None:
        itemsize = max(jnp.dtype(prediction.dtype).itemsize,
                       jnp.dtype(target.dtype).itemsize)
        batch_block = _pick_batch_block(B, H, W, itemsize)
    Bb = int(batch_block)
    assert B % Bb == 0, "batch_block must divide the batch size"
    steps = B // Bb
    # Split the serial batch walk across (up to) two TensorCores (v7x megacore);
    # on single-core chips the "parallel" axis is simply an outer loop.
    G0 = 2 if (steps >= 2 and steps % 2 == 0) else 1
    G1 = steps // G0

    def kernel(i_ref, j_ref, out_ref, acc_ref, bh_ref, bw_ref):
        g1 = pl.program_id(1)

        @pl.when(g1 == 0)
        def _init():
            acc_ref[...] = jnp.zeros_like(acc_ref)

            # Band-of-ones masks generated on-chip once per core (no HBM read,
            # no per-step recompute): band[i, j] = 1 iff |i - j| <= radius.
            def band(n):
                row = jax.lax.broadcasted_iota(jnp.int32, (n, n), 0)
                col = jax.lax.broadcasted_iota(jnp.int32, (n, n), 1)
                return (jnp.abs(row - col) <= radius).astype(jnp.float32)

            bh_ref[...] = band(H)
            bw_ref[...] = band(W)

        # Refs are (Bb, H, W) (channel dim squeezed by the BlockSpec);
        # cast to f32 in-kernel so bf16 inputs only pay bf16 HBM traffic.
        Iv = i_ref[...].astype(jnp.float32)
        Jv = j_ref[...].astype(jnp.float32)

        bh = bh_ref[...]                                    # (H, H), symmetric
        bw = bw_ref[...]                                    # (W, W), symmetric

        # Fuse the five box filters:
        #  - W stage: one wide MXU matmul with M = 5*Bb*H rows.
        #  - H stage: one batched matmul over the 5*Bb stacked images.
        S = jnp.concatenate([Iv, Jv, Iv * Iv, Jv * Jv, Iv * Jv], axis=0)   # (5Bb,H,W)
        Sw = jnp.dot(S.reshape(5 * Bb * H, W), bw,
                     preferred_element_type=jnp.float32)                   # (5Bb*H, W)
        T3 = Sw.reshape(5 * Bb, H, W)
        bh_b = jnp.broadcast_to(bh, (5 * Bb, H, H))
        R = jnp.einsum("nhk,nkw->nhw", bh_b, T3,
                       preferred_element_type=jnp.float32)                 # (5Bb, H, W)

        I_sum = R[0 * Bb:1 * Bb]
        J_sum = R[1 * Bb:2 * Bb]
        I2_sum = R[2 * Bb:3 * Bb]
        J2_sum = R[3 * Bb:4 * Bb]
        IJ_sum = R[4 * Bb:5 * Bb]

        # Algebraically identical to the PyTorch _compute_local_sums expansion
        # (u_I = I_sum/win, etc.), collapsed to 3 mul-subs per quantity.
        cross = IJ_sum - I_sum * J_sum * inv_win
        I_var = I2_sum - I_sum * I_sum * inv_win
        J_var = J2_sum - J_sum * J_sum * inv_win
        cc = cross * cross / (I_var * J_var + eps)

        # VPU-only accumulation each step; the cross-lane/sublane reduction is
        # deferred to the epilogue (once per core).
        acc_ref[...] = acc_ref[...] + cc

        @pl.when(g1 == pl.num_programs(1) - 1)
        def _finalize():
            out_ref[...] = jnp.broadcast_to(jnp.sum(acc_ref[...]), (1, 8, 128))

    partials = pl.pallas_call(
        kernel,
        out_shape=jax.ShapeDtypeStruct((G0, 8, 128), jnp.float32),
        grid_spec=pltpu.PrefetchScalarGridSpec(
            num_scalar_prefetch=0,
            grid=(G0, G1),
            in_specs=[
                pl.BlockSpec((Bb, pl.Squeezed(), H, W),
                             lambda g0, g1: (g0 * G1 + g1, 0, 0, 0)),
                pl.BlockSpec((Bb, pl.Squeezed(), H, W),
                             lambda g0, g1: (g0 * G1 + g1, 0, 0, 0)),
            ],
            out_specs=pl.BlockSpec((1, 8, 128), lambda g0, g1: (g0, 0, 0)),
            scratch_shapes=[
                pltpu.VMEM((Bb, H, W), jnp.float32),   # cc accumulator
                pltpu.VMEM((H, H), jnp.float32),       # cached H-stage band
                pltpu.VMEM((W, W), jnp.float32),       # cached W-stage band
            ],
        ),
        compiler_params=pltpu.CompilerParams(
            dimension_semantics=("parallel", "arbitrary"),
            vmem_limit_bytes=32 * 1024 * 1024),
    )(prediction, target)

    total_cc = jnp.sum(partials[:, 0, 0])
    return -jnp.sqrt(total_cc / count)


def ncc_loss_ref(prediction, target, kernel_size=KERNEL_SIZE, eps=EPS):
    """Plain-JAX reference mirroring the PyTorch forward (mask=None)."""
    filt = jnp.ones((1, 1, kernel_size, kernel_size), jnp.float32)
    pad = kernel_size // 2

    def conv(x):
        return jax.lax.conv_general_dilated(
            x, filt, window_strides=(1, 1),
            padding=[(pad, pad), (pad, pad)],
            dimension_numbers=("NCHW", "OIHW", "NCHW"))

    I = prediction.astype(jnp.float32)
    J = target.astype(jnp.float32)
    I_sum = conv(I); J_sum = conv(J)
    I2_sum = conv(I * I); J2_sum = conv(J * J); IJ_sum = conv(I * J)
    win = float(kernel_size * kernel_size)
    u_I = I_sum / win
    u_J = J_sum / win
    cross = IJ_sum - u_J * I_sum - u_I * J_sum + u_I * u_J * win
    I_var = I2_sum - 2.0 * u_I * I_sum + u_I * u_I * win
    J_var = J2_sum - 2.0 * u_J * J_sum + u_J * u_J * win
    cc = cross * cross / (I_var * J_var + eps)
    return -jnp.sqrt(jnp.mean(cc))


if __name__ == "__main__":
    key = jax.random.PRNGKey(0)
    k1, k2 = jax.random.split(key)
    B, C, H, W = 8, 1, 16, 16
    pred = jax.random.normal(k1, (B, C, H, W), jnp.float32)
    # target correlated with prediction so NCC is non-trivial
    target = pred + 0.1 * jax.random.normal(k2, (B, C, H, W), jnp.float32)

    loss_ref = jax.block_until_ready(ncc_loss_ref(pred, target))

    ok = True
    # Exercise both the multi-step grid (batch_block=2 -> grid=(2,2), accumulator
    # + per-core partials) and the auto-picked single-step configuration.
    for bb in (2, None):
        loss = jax.block_until_ready(ncc_loss_pallas(pred, target, batch_block=bb))
        if not np.allclose(np.asarray(loss), np.asarray(loss_ref),
                           rtol=1e-2, atol=1e-4):
            ok = False
            print("MISMATCH", bb, float(loss), float(loss_ref))

    if ok:
        print("KERNEL_OK")
</pallas_src>

<mosaic_0001>
module attributes {stable_mosaic.version = 11 : i64} {
  func.func @kernel(%arg0: i32, %arg1: i32, %arg2: memref<2x1x16x16xf32, #tpu.memory_space<vmem>>, %arg3: memref<2x1x16x16xf32, #tpu.memory_space<vmem>>, %arg4: memref<1x8x128xf32, #tpu.memory_space<vmem>>, %arg5: memref<2x16x16xf32, #tpu.memory_space<vmem>>, %arg6: memref<16x16xf32, #tpu.memory_space<vmem>>, %arg7: memref<16x16xf32, #tpu.memory_space<vmem>>) attributes {dimension_semantics = [#tpu.dimension_semantics<parallel>, #tpu.dimension_semantics<arbitrary>], iteration_bounds = array<i64: 2, 2>, scalar_prefetch = 0 : i64, scratch_operands = 3 : i64, tpu.core_type = #tpu.core_type<tc>, window_params = [{transform_indices = @transform_0, window_bounds = array<i64: 2, 1, 16, 16>}, {transform_indices = @transform_1, window_bounds = array<i64: 2, 1, 16, 16>}, {transform_indices = @transform_2, window_bounds = array<i64: 1, 8, 128>}]} {
    %c0_i32 = arith.constant 0 : i32
    %0 = arith.cmpi eq, %arg1, %c0_i32 : i32
    %1 = arith.extui %0 : i1 to i32
    %c0_i32_0 = arith.constant 0 : i32
    %2 = arith.cmpi ne, %1, %c0_i32_0 : i32
    scf.if %2 {
      %cst_24 = arith.constant 0.000000e+00 : f32
      %47 = vector.broadcast %cst_24 : f32 to vector<2x16x16xf32>
      %c0_25 = arith.constant 0 : index
      %c0_26 = arith.constant 0 : index
      %c0_27 = arith.constant 0 : index
      %48 = vector.load %arg5[%c0_25, %c0_26, %c0_27] : memref<2x16x16xf32, #tpu.memory_space<vmem>>, vector<2x16x16xf32>
      tpu.vector_store %arg5[%c0_25, %c0_26, %c0_27], %47 {strides = array<i32>} : memref<2x16x16xf32, #tpu.memory_space<vmem>>, vector<2x16x16xf32>,
      %49 = tpu.iota {dimensions = array<i32: 0>} : vector<16x16xi32>
      %50 = tpu.iota {dimensions = array<i32: 1>} : vector<16x16xi32>
      %51 = arith.subi %49, %50 : vector<16x16xi32>
      %52 = math.absi %51 : vector<16x16xi32>
      %c4_i32 = arith.constant 4 : i32
      %53 = vector.broadcast %c4_i32 : i32 to vector<16x16xi32>
      %54 = arith.cmpi sle, %52, %53 : vector<16x16xi32>
      %55 = arith.extui %54 : vector<16x16xi1> to vector<16x16xi32>
      %56 = arith.sitofp %55 : vector<16x16xi32> to vector<16x16xf32>
      %c0_28 = arith.constant 0 : index
      %c0_29 = arith.constant 0 : index
      %57 = vector.load %arg6[%c0_28, %c0_29] : memref<16x16xf32, #tpu.memory_space<vmem>>, vector<16x16xf32>
      tpu.vector_store %arg6[%c0_28, %c0_29], %56 {strides = array<i32>} : memref<16x16xf32, #tpu.memory_space<vmem>>, vector<16x16xf32>,
      %58 = tpu.iota {dimensions = array<i32: 0>} : vector<16x16xi32>
      %59 = tpu.iota {dimensions = array<i32: 1>} : vector<16x16xi32>
      %60 = arith.subi %58, %59 : vector<16x16xi32>
      %61 = math.absi %60 : vector<16x16xi32>
      %c4_i32_30 = arith.constant 4 : i32
      %62 = vector.broadcast %c4_i32_30 : i32 to vector<16x16xi32>
      %63 = arith.cmpi sle, %61, %62 : vector<16x16xi32>
      %64 = arith.extui %63 : vector<16x16xi1> to vector<16x16xi32>
      %65 = arith.sitofp %64 : vector<16x16xi32> to vector<16x16xf32>
      %c0_31 = arith.constant 0 : index
      %c0_32 = arith.constant 0 : index
      %66 = vector.load %arg7[%c0_31, %c0_32] : memref<16x16xf32, #tpu.memory_space<vmem>>, vector<16x16xf32>
      tpu.vector_store %arg7[%c0_31, %c0_32], %65 {strides = array<i32>} : memref<16x16xf32, #tpu.memory_space<vmem>>, vector<16x16xf32>,
    } else {
    }
    %c0 = arith.constant 0 : index
    %c0_1 = arith.constant 0 : index
    %c0_2 = arith.constant 0 : index
    %c0_3 = arith.constant 0 : index
    %3 = vector.load %arg2[%c0, %c0_1, %c0_2, %c0_3] : memref<2x1x16x16xf32, #tpu.memory_space<vmem>>, vector<2x1x16x16xf32>
    %4 = vector.shape_cast %3 : vector<2x1x16x16xf32> to vector<2x16x16xf32>
    %c0_4 = arith.constant 0 : index
    %c0_5 = arith.constant 0 : index
    %c0_6 = arith.constant 0 : index
    %c0_7 = arith.constant 0 : index
    %5 = vector.load %arg3[%c0_4, %c0_5, %c0_6, %c0_7] : memref<2x1x16x16xf32, #tpu.memory_space<vmem>>, vector<2x1x16x16xf32>
    %6 = vector.shape_cast %5 : vector<2x1x16x16xf32> to vector<2x16x16xf32>
    %c0_8 = arith.constant 0 : index
    %c0_9 = arith.constant 0 : index
    %7 = vector.load %arg6[%c0_8, %c0_9] : memref<16x16xf32, #tpu.memory_space<vmem>>, vector<16x16xf32>
    %c0_10 = arith.constant 0 : index
    %c0_11 = arith.constant 0 : index
    %8 = vector.load %arg7[%c0_10, %c0_11] : memref<16x16xf32, #tpu.memory_space<vmem>>, vector<16x16xf32>
    %9 = arith.mulf %4, %4 : vector<2x16x16xf32>
    %10 = arith.mulf %6, %6 : vector<2x16x16xf32>
    %11 = arith.mulf %4, %6 : vector<2x16x16xf32>
    %12 = tpu.concatenate %4, %6, %9, %10, %11 in 0 : vector<2x16x16xf32>, vector<2x16x16xf32>, vector<2x16x16xf32>, vector<2x16x16xf32>, vector<2x16x16xf32> -> vector<10x16x16xf32>
    %13 = vector.shape_cast %12 : vector<10x16x16xf32> to vector<160x16xf32>
    %cst = arith.constant dense<0.000000e+00> : vector<160x16xf32>
    %14 = tpu.matmul %13, %8, %cst {dimension_numbers = #tpu.dot_dimension_numbers<[1], [0], [0], [1], [0, 0, 1, 1], [], []>} : vector<160x16xf32>, vector<16x16xf32>, vector<160x16xf32> -> vector<160x16xf32>
    %15 = vector.shape_cast %14 : vector<160x16xf32> to vector<10x16x16xf32>
    %16 = vector.shape_cast %7 : vector<16x16xf32> to vector<1x16x16xf32>
    %17 = vector.broadcast %16 : vector<1x16x16xf32> to vector<10x16x16xf32>
    "tpu.trace_start"() <{level = 10 : i32, message = "nhk,nkw->nhw"}> : () -> ()
    %cst_12 = arith.constant dense<0.000000e+00> : vector<10x16x16xf32>
    %18 = tpu.matmul %17, %15, %cst_12 {dimension_numbers = #tpu.dot_dimension_numbers<[2], [1], [1], [2], [0, 0, 0, 1, 1, 2], [0], [0]>} : vector<10x16x16xf32>, vector<10x16x16xf32>, vector<10x16x16xf32> -> vector<10x16x16xf32>
    "tpu.trace_stop"() : () -> ()
    %19 = vector.extract_strided_slice %18 {offsets = [0, 0, 0], sizes = [2, 16, 16], strides = [1, 1, 1]} : vector<10x16x16xf32> to vector<2x16x16xf32>
    %20 = vector.extract_strided_slice %18 {offsets = [2, 0, 0], sizes = [2, 16, 16], strides = [1, 1, 1]} : vector<10x16x16xf32> to vector<2x16x16xf32>
    %21 = vector.extract_strided_slice %18 {offsets = [4, 0, 0], sizes = [2, 16, 16], strides = [1, 1, 1]} : vector<10x16x16xf32> to vector<2x16x16xf32>
    %22 = vector.extract_strided_slice %18 {offsets = [6, 0, 0], sizes = [2, 16, 16], strides = [1, 1, 1]} : vector<10x16x16xf32> to vector<2x16x16xf32>
    %23 = vector.extract_strided_slice %18 {offsets = [8, 0, 0], sizes = [2, 16, 16], strides = [1, 1, 1]} : vector<10x16x16xf32> to vector<2x16x16xf32>
    %24 = arith.mulf %19, %20 : vector<2x16x16xf32>
    %cst_13 = arith.constant 0.0123456791 : f32
    %25 = vector.broadcast %cst_13 : f32 to vector<2x16x16xf32>
    %26 = arith.mulf %24, %25 : vector<2x16x16xf32>
    %27 = arith.subf %23, %26 : vector<2x16x16xf32>
    %28 = arith.mulf %19, %19 : vector<2x16x16xf32>
    %cst_14 = arith.constant 0.0123456791 : f32
    %29 = vector.broadcast %cst_14 : f32 to vector<2x16x16xf32>
    %30 = arith.mulf %28, %29 : vector<2x16x16xf32>
    %31 = arith.subf %21, %30 : vector<2x16x16xf32>
    %32 = arith.mulf %20, %20 : vector<2x16x16xf32>
    %cst_15 = arith.constant 0.0123456791 : f32
    %33 = vector.broadcast %cst_15 : f32 to vector<2x16x16xf32>
    %34 = arith.mulf %32, %33 : vector<2x16x16xf32>
    %35 = arith.subf %22, %34 : vector<2x16x16xf32>
    %36 = arith.mulf %27, %27 : vector<2x16x16xf32>
    %37 = arith.mulf %31, %35 : vector<2x16x16xf32>
    %cst_16 = arith.constant 9.99999974E-6 : f32
    %38 = vector.broadcast %cst_16 : f32 to vector<2x16x16xf32>
    %39 = arith.addf %37, %38 : vector<2x16x16xf32>
    %40 = arith.divf %36, %39 : vector<2x16x16xf32>
    %c0_17 = arith.constant 0 : index
    %c0_18 = arith.constant 0 : index
    %c0_19 = arith.constant 0 : index
    %41 = vector.load %arg5[%c0_17, %c0_18, %c0_19] : memref<2x16x16xf32, #tpu.memory_space<vmem>>, vector<2x16x16xf32>
    %42 = arith.addf %41, %40 : vector<2x16x16xf32>
    %c0_20 = arith.constant 0 : index
    %c0_21 = arith.constant 0 : index
    %c0_22 = arith.constant 0 : index
    %43 = vector.load %arg5[%c0_20, %c0_21, %c0_22] : memref<2x16x16xf32, #tpu.memory_space<vmem>>, vector<2x16x16xf32>
    tpu.vector_store %arg5[%c0_20, %c0_21, %c0_22], %42 {strides = array<i32>} : memref<2x16x16xf32, #tpu.memory_space<vmem>>, vector<2x16x16xf32>,
    %c1_i32 = arith.constant 1 : i32
    %44 = arith.cmpi eq, %arg1, %c1_i32 : i32
    %45 = arith.extui %44 : i1 to i32
    %c0_i32_23 = arith.constant 0 : i32
    %46 = arith.cmpi ne, %45, %c0_i32_23 : i32
    scf.if %46 {
      %c0_24 = arith.constant 0 : index
      %c0_25 = arith.constant 0 : index
      %c0_26 = arith.constant 0 : index
      %47 = vector.load %arg5[%c0_24, %c0_25, %c0_26] : memref<2x16x16xf32, #tpu.memory_space<vmem>>, vector<2x16x16xf32>
      %48 = vector.shape_cast %47 : vector<2x16x16xf32> to vector<1x2x16x16xf32>
      %cst_27 = arith.constant dense<0.000000e+00> : vector<1xf32>
      %49 = vector.multi_reduction <add>, %48, %cst_27 [1, 2, 3] : vector<1x2x16x16xf32> to vector<1xf32>
      %50 = vector.shape_cast %49 : vector<1xf32> to vector<1x1x1x1xf32>
      %51 = vector.extract %50[0, 0, 0, 0] : f32 from vector<1x1x1x1xf32>
      %52 = vector.broadcast %51 : f32 to vector<1x8x128xf32>
      %c0_28 = arith.constant 0 : index
      %c0_29 = arith.constant 0 : index
      %c0_30 = arith.constant 0 : index
      %53 = vector.load %arg4[%c0_28, %c0_29, %c0_30] : memref<1x8x128xf32, #tpu.memory_space<vmem>>, vector<1x8x128xf32>
      tpu.vector_store %arg4[%c0_28, %c0_29, %c0_30], %52 {strides = array<i32>} : memref<1x8x128xf32, #tpu.memory_space<vmem>>, vector<1x8x128xf32>,
    } else {
    }
    return
  }
  func.func @transform_0(%arg0: i32, %arg1: i32) -> (i32, i32, i32, i32) {
    %c2_i32 = arith.constant 2 : i32
    %0 = arith.muli %arg0, %c2_i32 : i32
    %1 = arith.addi %0, %arg1 : i32
    %c0_i32 = arith.constant 0 : i32
    %c0_i32_0 = arith.constant 0 : i32
    %c0_i32_1 = arith.constant 0 : i32
    %c0_i32_2 = arith.constant 0 : i32
    return %1, %c0_i32, %c0_i32_0, %c0_i32_1 : i32, i32, i32, i32
  }
  func.func @transform_1(%arg0: i32, %arg1: i32) -> (i32, i32, i32, i32) {
    %c2_i32 = arith.constant 2 : i32
    %0 = arith.muli %arg0, %c2_i32 : i32
    %1 = arith.addi %0, %arg1 : i32
    %c0_i32 = arith.constant 0 : i32
    %c0_i32_0 = arith.constant 0 : i32
    %c0_i32_1 = arith.constant 0 : i32
    %c0_i32_2 = arith.constant 0 : i32
    return %1, %c0_i32, %c0_i32_0, %c0_i32_1 : i32, i32, i32, i32
  }
  func.func @transform_2(%arg0: i32, %arg1: i32) -> (i32, i32, i32) {
    %c0_i32 = arith.constant 0 : i32
    %c0_i32_0 = arith.constant 0 : i32
    %c0_i32_1 = arith.constant 0 : i32
    return %arg0, %c0_i32, %c0_i32_0 : i32, i32, i32
  }
}

</mosaic_0001>

<llo_original>
// kernel: tpu_custom_call.1
$region0: #{tpu_custom_call.1}
  #allocation0 [shape = 'u32[]', space=smem, size = 0x4, offset = 0x4, fixed_abs, tag = 'smem constant byte address 0x4 - core index']
  #allocation1 [shape = 'u32[72,128]{1,0:T(1,128)}', space=vmem, size = 0x9000, scoped, tag = 'internal scratch']
  #allocation2 [shape = 'f32[2,16,16]{2,1,0:T(8,128)}', space=vmem, size = 0x4000, scoped, tag = 'scratch operand']
  #allocation3 [shape = 'f32[16,16]{1,0:T(8,128)}', space=vmem, size = 0x2000, scoped, tag = 'scratch operand']
  #allocation4 [shape = 'f32[16,16]{1,0:T(8,128)}', space=vmem, size = 0x2000, scoped, tag = 'scratch operand']
  %s0 = inlined_call_operand.hbm [shape: f32[8,1,16,16], index: 0, kind: input, shape index: {}]
  %s1 = inlined_call_operand.hbm [shape: f32[8,1,16,16], index: 1, kind: input, shape index: {}]
  %s2 = inlined_call_operand.hbm [shape: f32[2,8,128], index: 2, kind: output, shape index: {}]
  %s3 = sld [smem:[#allocation0]]
  $region57: #{tpu_custom_call.1} parent=0
    _
  %s5 = ssub.s32 1, %s3
  %s6 = scalar_select 0, %s5, %s3
  $region1: #{tpu_custom_call.1} parent=0
    #allocation5 [shape = 'u8[32768]{0}', space=vmem, size = 0x8000, scoped, tag = 'input window, operand 0']
    #allocation6 [shape = 's32[2]{0}', space=sflag, size = 0x8, scoped, tag = 'scoped memory for tpu_custom_call.1']
    #allocation7 [shape = 's32[2]{0}', space=sflag, size = 0x8, scoped, tag = 'scoped memory for tpu_custom_call.1']
    #allocation8 [shape = 'u8[32768]{0}', space=vmem, size = 0x8000, scoped, tag = 'input window, operand 1']
    #allocation9 [shape = 's32[2]{0}', space=sflag, size = 0x8, scoped, tag = 'scoped memory for tpu_custom_call.1']
    #allocation10 [shape = 'u8[8192]{0}', space=vmem, size = 0x2000, scoped, tag = 'output window, operand 0']
    %7 = vsyncpa [#allocation6], 0
    %s8 = scalar_lea.sflag [#allocation6], 1
    %9 = vsyncpa %s8, 0
    %10 = vsyncpa [#allocation9], 0
    %s11 = scalar_lea.sflag [#allocation9], 1
    %12 = vsyncpa %s11, 0
    %13 = vsyncpa [#allocation7], 0
    %s14 = scalar_lea.sflag [#allocation7], 1
    %15 = vsyncpa %s14, 0
    loop: start=0, step=1, limit=6
    $region2: #{tpu_custom_call.1} parent=1 // loop_pre_header
      _
    $region3: #{tpu_custom_call.1} parent=1 // loop_header
      %s17 = sphi 0, %s21
      %p18 = scmp.ge.s32.totalorder %s17, 6
      %s24 = sphi 0, %s36
      %s25 = sphi 0, %s32
      %s26 = sphi 0, %s24
      %s27 = sphi 0, %s25
      %s28 = sphi 0, %s26
      %s29 = sphi 0, %s27
      %s43 = sphi 0, %s45
      %s46 = sphi 0, %s43
      %s47 = sphi 0, %s46
      %s63 = sphi 0, %s47
      %s73 = sphi 0, %s75
      %s76 = sphi 0, %s73
      %s77 = sphi 0, %s76
      %s93 = sphi 0, %s77
      %s99 = sphi 0, %s101
      %s102 = sphi 0, %s99
      %s103 = sphi 0, %s102
      %s119 = sphi 0, %s103
    $region4: #{tpu_custom_call.1} parent=1 // loop_header_branch
      %20 = sbr.rel (%p18) target = $region8
    $region5: #{tpu_custom_call.1} parent=1 // loop_body
      %s22 = ssub.s32 %s17, 1
      %s23 = ssub.s32 %s17, 2
      %s30 = sadd.s32 1, %s25
      %p31 = scmp.ge.s32.totalorder %s30, 2
      %s32 = scalar_select %p31, 0, %s30
      %s33 = sadd.s32 1, %s24
      %s34 = scalar_select %p31, %s33, %s24
      %p35 = scmp.ge.s32.totalorder %s34, 2
      %s36 = scalar_select %p35, 0, %s34
      %s37 = smul.u32 %s24, 2
      %s38 = sadd.s32 %s37, %s25
      %s39 = smul.u32 %s36, 2
      %s40 = sadd.s32 %s39, %s32
      %s41 = ssub.s32 %s38, %s40
      %p42 = scmp.eq.s32.totalorder %s41, 0
      %s44 = sadd.s32 %s43, 1
      %s45 = scalar_select %p42, %s43, %s44
      %p48 = pneg %p42
      %p49 = scmp.eq.s32.totalorder %s17, 3
      %p50 = por %p48, %p49
      %p51 = scmp.ne.s32.totalorder %s43, %s46
      %p52 = scmp.eq.s32.totalorder %s17, 0
      %p53 = por %p51, %p52
      %p54 = scmp.ne.s32.totalorder %s43, %s46
      %p55 = scmp.eq.s32.totalorder %s22, 3
      %p56 = por %p54, %p55
      %p57 = scmp.ne.s32.totalorder %s46, %s47
      %p58 = scmp.eq.s32.totalorder %s22, 0
      %p59 = por %p57, %p58
      %p60 = scmp.ne.s32.totalorder %s46, %s47
      %p61 = scmp.eq.s32.totalorder %s23, 3
      %p62 = por %p60, %p61
      %p64 = scmp.ne.s32.totalorder %s47, %s63
      %p65 = scmp.eq.s32.totalorder %s23, 0
      %p66 = por %p64, %p65
      %s67 = smul.u32 %s24, 2
      %s68 = sadd.s32 %s67, %s25
      %s69 = smul.u32 %s36, 2
      %s70 = sadd.s32 %s69, %s32
      %s71 = ssub.s32 %s68, %s70
      %p72 = scmp.eq.s32.totalorder %s71, 0
      %s74 = sadd.s32 %s73, 1
      %s75 = scalar_select %p72, %s73, %s74
      %p78 = pneg %p72
      %p79 = scmp.eq.s32.totalorder %s17, 3
      %p80 = por %p78, %p79
      %p81 = scmp.ne.s32.totalorder %s73, %s76
      %p82 = scmp.eq.s32.totalorder %s17, 0
      %p83 = por %p81, %p82
      %p84 = scmp.ne.s32.totalorder %s73, %s76
      %p85 = scmp.eq.s32.totalorder %s22, 3
      %p86 = por %p84, %p85
      %p87 = scmp.ne.s32.totalorder %s76, %s77
      %p88 = scmp.eq.s32.totalorder %s22, 0
      %p89 = por %p87, %p88
      %p90 = scmp.ne.s32.totalorder %s76, %s77
      %p91 = scmp.eq.s32.totalorder %s23, 3
      %p92 = por %p90, %p91
      %p94 = scmp.ne.s32.totalorder %s77, %s93
      %p95 = scmp.eq.s32.totalorder %s23, 0
      %p96 = por %p94, %p95
      %s97 = ssub.s32 %s24, %s36
      %p98 = scmp.eq.s32.totalorder %s97, 0
      %s100 = sadd.s32 %s99, 1
      %s101 = scalar_select %p98, %s99, %s100
      %p104 = pneg %p98
      %p105 = scmp.eq.s32.totalorder %s17, 3
      %p106 = por %p104, %p105
      %p107 = scmp.ne.s32.totalorder %s99, %s102
      %p108 = scmp.eq.s32.totalorder %s17, 0
      %p109 = por %p107, %p108
      %p110 = scmp.ne.s32.totalorder %s99, %s102
      %p111 = scmp.eq.s32.totalorder %s22, 3
      %p112 = por %p110, %p111
      %p113 = scmp.ne.s32.totalorder %s102, %s103
      %p114 = scmp.eq.s32.totalorder %s22, 0
      %p115 = por %p113, %p114
      %p116 = scmp.ne.s32.totalorder %s102, %s103
      %p117 = scmp.eq.s32.totalorder %s23, 3
      %p118 = por %p116, %p117
      %p120 = scmp.ne.s32.totalorder %s103, %s119
      %p121 = scmp.eq.s32.totalorder %s23, 0
      %p122 = por %p120, %p121
      %p123 = scmp.le.s32.totalorder 1, %s17
      %p124 = scmp.lt.s32.totalorder %s17, 5
      %p125 = pnand %p123, %p124
      %p126 = pneg %p125
      // Predicated region
      $region9: #{tpu_custom_call.1} parent=5 // pred_check
        _
      $region10: #{tpu_custom_call.1} parent=5 // pred_check_branch
        %128 = sbr.rel (%p125) target = $region12
      $region11: #{tpu_custom_call.1} parent=5 // pred_region
        %s129 = ssub.s32 %s17, 1
      $region12: #{tpu_custom_call.1} parent=5 // pred_fallthru
        _
      %p130 = scmp.lt.s32.totalorder %s17, 4
      // Predicated region
      $region13: #{tpu_custom_call.1} parent=5 // pred_check
        %p131 = pneg %p130
      $region14: #{tpu_custom_call.1} parent=5 // pred_check_branch
        %133 = sbr.rel (%p131) target = $region16
      $region15: #{tpu_custom_call.1} parent=5 // pred_region
        // Predicated region
        $region17: #{tpu_custom_call.1} parent=15 // pred_check
          %p134 = pneg %p53
        $region18: #{tpu_custom_call.1} parent=15 // pred_check_branch
          %136 = sbr.rel (%p134) target = $region20
        $region19: #{tpu_custom_call.1} parent=15 // pred_region
          %s137 = sand.u32 %s43, 1
          %s138 = scalar_lea.sflag [#allocation6], %s137
          %s139 = sand.u32 %s43, 1
          %s140 = smul.addr %s139, 32
          %s141 = scalar_lea.vmem [#allocation5], %s140
          %s142 = smul.u32 %s24, 2
          %s143 = sadd.s32 %s142, %s25
          %s144 = smul.u32 2, %s143
          %146 = vsyncadd %s138, 0
          %s147 = smul.addr %s144, 2
          %s148 = smul.addr %s147, 8
          %s149 = scalar_lea.hbm %s0, %s148
          %s150 = sshll.u32 %s149, 4
          %s151 = int_to_ptr.hbm [resolvable:$true] %s150
          %s152 = sshll.u32 %s141, 4
          %s153 = int_to_ptr.vmem [resolvable:$true] %s152
          %158 = dma.hbm_to_vmem [thread:$0]  %s151, 512, %s153, %s138, 128, 128, 8
        $region20: #{tpu_custom_call.1} parent=15 // pred_fallthru
          _
        // Predicated region
        $region21: #{tpu_custom_call.1} parent=15 // pred_check
          %p159 = pneg %p83
        $region22: #{tpu_custom_call.1} parent=15 // pred_check_branch
          %161 = sbr.rel (%p159) target = $region24
        $region23: #{tpu_custom_call.1} parent=15 // pred_region
          %s162 = sand.u32 %s73, 1
          %s163 = scalar_lea.sflag [#allocation9], %s162
          %s164 = sand.u32 %s73, 1
          %s165 = smul.addr %s164, 32
          %s166 = scalar_lea.vmem [#allocation8], %s165
          %s167 = smul.u32 %s24, 2
          %s168 = sadd.s32 %s167, %s25
          %s169 = smul.u32 2, %s168
          %171 = vsyncadd %s163, 0
          %s172 = smul.addr %s169, 2
          %s173 = smul.addr %s172, 8
          %s174 = scalar_lea.hbm %s1, %s173
          %s175 = sshll.u32 %s174, 4
          %s176 = int_to_ptr.hbm [resolvable:$true] %s175
          %s177 = sshll.u32 %s166, 4
          %s178 = int_to_ptr.vmem [resolvable:$true] %s177
          %183 = dma.hbm_to_vmem [thread:$0]  %s176, 512, %s178, %s163, 128, 128, 8
        $region24: #{tpu_custom_call.1} parent=15 // pred_fallthru
          _
      $region16: #{tpu_custom_call.1} parent=5 // pred_fallthru
        _
      %p184 = scmp.le.s32.totalorder 1, %s17
      %p185 = scmp.lt.s32.totalorder %s17, 5
      %p186 = pnand %p184, %p185
      %p187 = pneg %p186
      // Predicated region
      $region25: #{tpu_custom_call.1} parent=5 // pred_check
        _
      $region26: #{tpu_custom_call.1} parent=5 // pred_check_branch
        %189 = sbr.rel (%p186) target = $region28
      $region27: #{tpu_custom_call.1} parent=5 // pred_region
        %s190 = ssub.s32 %s17, 1
        %s191 = sand.u32 %s46, 1
        %s192 = scalar_lea.sflag [#allocation6], %s191
        %s193 = sand.u32 %s46, 1
        %s194 = smul.addr %s193, 32
        %s195 = scalar_lea.vmem [#allocation5], %s194
        // Predicated region
        $region29: #{tpu_custom_call.1} parent=27 // pred_check
          %p196 = pneg %p59
        $region30: #{tpu_custom_call.1} parent=27 // pred_check_branch
          %198 = sbr.rel (%p196) target = $region32
        $region31: #{tpu_custom_call.1} parent=27 // pred_region
          %200 = dma.done %s192, 512
        $region32: #{tpu_custom_call.1} parent=27 // pred_fallthru
          _
        %s201 = sand.u32 %s76, 1
        %s202 = scalar_lea.sflag [#allocation9], %s201
        %s203 = sand.u32 %s76, 1
        %s204 = smul.addr %s203, 32
        %s205 = scalar_lea.vmem [#allocation8], %s204
        // Predicated region
        $region33: #{tpu_custom_call.1} parent=27 // pred_check
          %p206 = pneg %p89
        $region34: #{tpu_custom_call.1} parent=27 // pred_check_branch
          %208 = sbr.rel (%p206) target = $region36
        $region35: #{tpu_custom_call.1} parent=27 // pred_region
          %210 = dma.done %s202, 512
        $region36: #{tpu_custom_call.1} parent=27 // pred_fallthru
          _
        %s211 = sand.u32 %s46, 1
        %s212 = scalar_lea.sflag [#allocation6], %s211
        %s213 = sand.u32 %s46, 1
        %s214 = smul.addr %s213, 32
        %s215 = scalar_lea.vmem [#allocation5], %s214
        %p216 = pneg %p59
        %p217 = pneg %p56
        %s218 = sand.u32 %s76, 1
        %s219 = scalar_lea.sflag [#allocation9], %s218
        %s220 = sand.u32 %s76, 1
        %s221 = smul.addr %s220, 32
        %s222 = scalar_lea.vmem [#allocation8], %s221
        %p223 = pneg %p89
        %p224 = pneg %p86
        %p225 = pneg %p115
        %p226 = pneg %p112
        %s227 = sand.u32 %s102, 1
        %s228 = scalar_lea.sflag [#allocation7], %s227
        %s229 = sand.u32 %s102, 1
        %s230 = smul.addr %s229, 8
        %s231 = scalar_lea.vmem [#allocation10], %s230
        %s232 = smul.u32 %s26, 2
        %s233 = sadd.s32 %s232, %s27
        %s234 = smul.u32 2, %s233
        %s235 = smul.u32 %s26, 2
        %s236 = sadd.s32 %s235, %s27
        %s237 = smul.u32 2, %s236
        %p238 = scmp.eq.s32.totalorder %s27, 0
        // Predicated region
        $region37: #{tpu_custom_call.1} parent=27 // pred_check
          %p239 = pneg %p238
        $region38: #{tpu_custom_call.1} parent=27 // pred_check_branch
          %241 = sbr.rel (%p239) target = $region40
        $region39: #{tpu_custom_call.1} parent=27 // pred_region
          %vm242 = vcmask 130048
          %243 = vst.msk [vmem:[#allocation2] sm:$0xff] %vm242, 0.0
          %244 = vst.msk [vmem:[#allocation2 + $0x8] sm:$0xff] %vm242, 0.0
          %245 = vst.msk [vmem:[#allocation2 + $0x10] sm:$0xff] %vm242, 0.0
          %246 = vst.msk [vmem:[#allocation2 + $0x18] sm:$0xff] %vm242, 0.0
          %v247 = vlaneseq
          %v248 = vshrl.u32 %v247, 7
          %v249 = vadd.s32 %v248, 8
          %v250 = vlaneseq
          %v251 = vand.u32 %v250, 127
          %v252 = vsub.s32 %v248, %v251
          %v253 = vsub.s32 %v249, %v251
          %vm254 = vcmp.lt.s32.totalorder %v252, 0
          %v255 = vsub.s32 0, %v252
          %v256 = vsel %vm254, %v255, %v252
          %vm257 = vcmp.lt.s32.totalorder %v253, 0
          %v258 = vsub.s32 0, %v253
          %v259 = vsel %vm257, %v258, %v253
          %vm260 = vcmp.le.s32.totalorder %v256, 4
          %vm261 = vcmp.le.s32.totalorder %v259, 4
          %v262 = vsel %vm260, 1, 0
          %v263 = vsel %vm261, 1, 0
          %v264 = vcvt.s32.f32 %v262
          %v265 = vcvt.s32.f32 %v263
          %266 = vst.msk [vmem:[#allocation3] sm:$0xff] %vm242, %v264
          %267 = vst.msk [vmem:[#allocation3 + $0x8] sm:$0xff] %vm242, %v265
          %268 = vst.msk [vmem:[#allocation4] sm:$0xff] %vm242, %v264
          %269 = vst.msk [vmem:[#allocation4 + $0x8] sm:$0xff] %vm242, %v265
        $region40: #{tpu_custom_call.1} parent=27 // pred_fallthru
          _
        %v270 = vld [vmem:[%s195] sm:$0xff]
        %v271 = vld [vmem:[%s195 + $0x8] sm:$0xff]
        %v272 = vld [vmem:[%s195 + $0x10] sm:$0xff]
        %v273 = vld [vmem:[%s195 + $0x18] sm:$0xff]
        %v274 = vld [vmem:[%s205] sm:$0xff]
        %v275 = vld [vmem:[%s205 + $0x8] sm:$0xff]
        %v276 = vld [vmem:[%s205 + $0x10] sm:$0xff]
        %v277 = vld [vmem:[%s205 + $0x18] sm:$0xff]
        %v278 = vld [vmem:[#allocation3] sm:$0xff]
        %v279 = vld [vmem:[#allocation3 + $0x8] sm:$0xff]
        %v280 = vld [vmem:[#allocation4] sm:$0xff]
        %v281 = vld [vmem:[#allocation4 + $0x8] sm:$0xff]
        %v282 = vmul.f32 %v270, %v270
        %v283 = vmul.f32 %v271, %v271
        %v284 = vmul.f32 %v272, %v272
        %v285 = vmul.f32 %v273, %v273
        %v286 = vmul.f32 %v274, %v274
        %v287 = vmul.f32 %v275, %v275
        %v288 = vmul.f32 %v276, %v276
        %v289 = vmul.f32 %v277, %v277
        %v290 = vmul.f32 %v270, %v274
        %v291 = vmul.f32 %v271, %v275
        %v292 = vmul.f32 %v272, %v276
        %v293 = vmul.f32 %v273, %v277
        %vm294 = vcmask 130048
        %v296 = vsel %vm294, %v270, 0
        %v299 = vsel %vm294, %v271, 0
        %v302 = vsel %vm294, %v272, 0
        %v305 = vsel %vm294, %v273, 0
        %v308 = vsel %vm294, %v274, 0
        %v311 = vsel %vm294, %v275, 0
        %v314 = vsel %vm294, %v276, 0
        %v317 = vsel %vm294, %v277, 0
        %v320 = vsel %vm294, %v282, 0
        %v323 = vsel %vm294, %v283, 0
        %v326 = vsel %vm294, %v284, 0
        %v329 = vsel %vm294, %v285, 0
        %v332 = vsel %vm294, %v286, 0
        %v335 = vsel %vm294, %v287, 0
        %v338 = vsel %vm294, %v288, 0
        %v341 = vsel %vm294, %v289, 0
        %v344 = vsel %vm294, %v290, 0
        %v347 = vsel %vm294, %v291, 0
        %v350 = vsel %vm294, %v292, 0
        %v353 = vsel %vm294, %v293, 0
        %355 = vmatpush.msra.mxu0 0.0
        %356 = vmatpush.msra.mxu0 0.0
        %357 = vmatpush.msra.mxu0 0.0
        %358 = vmatpush.msra.mxu0 0.0
        %359 = vmatpush.msra.mxu0 0.0
        %360 = vmatpush.msra.mxu0 0.0
        %361 = vmatpush.msra.mxu0 0.0
        %362 = vmatpush.msra.mxu0 0.0
        %363 = vmatpush.msra.mxu0 0.0
        %364 = vmatpush.msra.mxu0 0.0
        %365 = vmatpush.msra.mxu0 0.0
        %366 = vmatpush.msra.mxu0 0.0
        %367 = vmatpush.msra.mxu0 0.0
        %368 = vmatpush.msra.mxu0 0.0
        %369 = vmatpush.msra.mxu0 %v281
        %370 = vmatpush.msra.mxu0 %v280
        %371 = vmatmul.f32.gmra.mxu0 %v296
        %v372 = vpop.f32.mrf.mxu0
        %v373 = vadd.f32 0.0, %v372
        %374 = vmatmul.f32.gmra.mxu0 %v299
        %v375 = vpop.f32.mrf.mxu0
        %v376 = vadd.f32 0.0, %v375
        %377 = vmatmul.f32.gmra.mxu0 %v302
        %v378 = vpop.f32.mrf.mxu0
        %v379 = vadd.f32 0.0, %v378
        %380 = vmatmul.f32.gmra.mxu0 %v305
        %v381 = vpop.f32.mrf.mxu0
        %v382 = vadd.f32 0.0, %v381
        %383 = vmatmul.f32.gmra.mxu0 %v308
        %v384 = vpop.f32.mrf.mxu0
        %v385 = vadd.f32 0.0, %v384
        %386 = vmatmul.f32.gmra.mxu0 %v311
        %v387 = vpop.f32.mrf.mxu0
        %v388 = vadd.f32 0.0, %v387
        %389 = vmatmul.f32.gmra.mxu0 %v314
        %v390 = vpop.f32.mrf.mxu0
        %v391 = vadd.f32 0.0, %v390
        %392 = vmatmul.f32.gmra.mxu0 %v317
        %v393 = vpop.f32.mrf.mxu0
        %v394 = vadd.f32 0.0, %v393
        %395 = vmatmul.f32.gmra.mxu0 %v320
        %v396 = vpop.f32.mrf.mxu0
        %v397 = vadd.f32 0.0, %v396
        %398 = vmatmul.f32.gmra.mxu0 %v323
        %v399 = vpop.f32.mrf.mxu0
        %v400 = vadd.f32 0.0, %v399
        %401 = vmatmul.f32.gmra.mxu0 %v326
        %v402 = vpop.f32.mrf.mxu0
        %v403 = vadd.f32 0.0, %v402
        %404 = vmatmul.f32.gmra.mxu0 %v329
        %v405 = vpop.f32.mrf.mxu0
        %v406 = vadd.f32 0.0, %v405
        %407 = vmatmul.f32.gmra.mxu0 %v332
        %v408 = vpop.f32.mrf.mxu0
        %v409 = vadd.f32 0.0, %v408
        %410 = vmatmul.f32.gmra.mxu0 %v335
        %v411 = vpop.f32.mrf.mxu0
        %v412 = vadd.f32 0.0, %v411
        %413 = vmatmul.f32.gmra.mxu0 %v338
        %v414 = vpop.f32.mrf.mxu0
        %v415 = vadd.f32 0.0, %v414
        %416 = vmatmul.f32.gmra.mxu0 %v341
        %v417 = vpop.f32.mrf.mxu0
        %v418 = vadd.f32 0.0, %v417
        %419 = vmatmul.f32.gmra.mxu0 %v344
        %v420 = vpop.f32.mrf.mxu0
        %v421 = vadd.f32 0.0, %v420
        %422 = vmatmul.f32.gmra.mxu0 %v347
        %v423 = vpop.f32.mrf.mxu0
        %v424 = vadd.f32 0.0, %v423
        %425 = vmatmul.f32.gmra.mxu0 %v350
        %v426 = vpop.f32.mrf.mxu0
        %v427 = vadd.f32 0.0, %v426
        %428 = vmatmul.f32.gmra.mxu0 %v353
        %v429 = vpop.f32.mrf.mxu0
        %v430 = vadd.f32 0.0, %v429
        %431 = vdwg.mxu0
        %v433 = vsel %vm294, %v278, 0
        %v436 = vsel %vm294, %v279, 0
        %438 = vmatpush.msra.mxu0 0.0
        %439 = vmatpush.msra.mxu0 0.0
        %440 = vmatpush.msra.mxu0 0.0
        %441 = vmatpush.msra.mxu0 0.0
        %442 = vmatpush.msra.mxu0 0.0
        %443 = vmatpush.msra.mxu0 0.0
        %444 = vmatpush.msra.mxu0 0.0
        %445 = vmatpush.msra.mxu0 0.0
        %446 = vmatpush.msra.mxu0 0.0
        %447 = vmatpush.msra.mxu0 0.0
        %448 = vmatpush.msra.mxu0 0.0
        %449 = vmatpush.msra.mxu0 0.0
        %450 = vmatpush.msra.mxu0 0.0
        %451 = vmatpush.msra.mxu0 0.0
        %452 = vmatpush.msra.mxu0 %v376
        %453 = vmatpush.msra.mxu0 %v373
        %454 = vmatmul.f32.gmra.mxu0 %v433
        %v455 = vpop.f32.mrf.mxu0
        %v456 = vadd.f32 0.0, %v455
        %457 = vmatmul.f32.gmra.mxu0 %v436
        %v458 = vpop.f32.mrf.mxu0
        %v459 = vadd.f32 0.0, %v458
        %460 = vdwg.mxu0
        %461 = vmatpush.msra.mxu0 0.0
        %462 = vmatpush.msra.mxu0 0.0
        %463 = vmatpush.msra.mxu0 0.0
        %464 = vmatpush.msra.mxu0 0.0
        %465 = vmatpush.msra.mxu0 0.0
        %466 = vmatpush.msra.mxu0 0.0
        %467 = vmatpush.msra.mxu0 0.0
        %468 = vmatpush.msra.mxu0 0.0
        %469 = vmatpush.msra.mxu0 0.0
        %470 = vmatpush.msra.mxu0 0.0
        %471 = vmatpush.msra.mxu0 0.0
        %472 = vmatpush.msra.mxu0 0.0
        %473 = vmatpush.msra.mxu0 0.0
        %474 = vmatpush.msra.mxu0 0.0
        %475 = vmatpush.msra.mxu0 %v382
        %476 = vmatpush.msra.mxu0 %v379
        %477 = vmatmul.f32.gmra.mxu0 %v433
        %v478 = vpop.f32.mrf.mxu0
        %v479 = vadd.f32 0.0, %v478
        %480 = vmatmul.f32.gmra.mxu0 %v436
        %v481 = vpop.f32.mrf.mxu0
        %v482 = vadd.f32 0.0, %v481
        %483 = vdwg.mxu0
        %484 = vmatpush.msra.mxu0 0.0
        %485 = vmatpush.msra.mxu0 0.0
        %486 = vmatpush.msra.mxu0 0.0
        %487 = vmatpush.msra.mxu0 0.0
        %488 = vmatpush.msra.mxu0 0.0
        %489 = vmatpush.msra.mxu0 0.0
        %490 = vmatpush.msra.mxu0 0.0
        %491 = vmatpush.msra.mxu0 0.0
        %492 = vmatpush.msra.mxu0 0.0
        %493 = vmatpush.msra.mxu0 0.0
        %494 = vmatpush.msra.mxu0 0.0
        %495 = vmatpush.msra.mxu0 0.0
        %496 = vmatpush.msra.mxu0 0.0
        %497 = vmatpush.msra.mxu0 0.0
        %498 = vmatpush.msra.mxu0 %v388
        %499 = vmatpush.msra.mxu0 %v385
        %500 = vmatmul.f32.gmra.mxu0 %v433
        %v501 = vpop.f32.mrf.mxu0
        %v502 = vadd.f32 0.0, %v501
        %503 = vmatmul.f32.gmra.mxu0 %v436
        %v504 = vpop.f32.mrf.mxu0
        %v505 = vadd.f32 0.0, %v504
        %506 = vdwg.mxu0
        %507 = vmatpush.msra.mxu0 0.0
        %508 = vmatpush.msra.mxu0 0.0
        %509 = vmatpush.msra.mxu0 0.0
        %510 = vmatpush.msra.mxu0 0.0
        %511 = vmatpush.msra.mxu0 0.0
        %512 = vmatpush.msra.mxu0 0.0
        %513 = vmatpush.msra.mxu0 0.0
        %514 = vmatpush.msra.mxu0 0.0
        %515 = vmatpush.msra.mxu0 0.0
        %516 = vmatpush.msra.mxu0 0.0
        %517 = vmatpush.msra.mxu0 0.0
        %518 = vmatpush.msra.mxu0 0.0
        %519 = vmatpush.msra.mxu0 0.0
        %520 = vmatpush.msra.mxu0 0.0
        %521 = vmatpush.msra.mxu0 %v394
        %522 = vmatpush.msra.mxu0 %v391
        %523 = vmatmul.f32.gmra.mxu0 %v433
        %v524 = vpop.f32.mrf.mxu0
        %v525 = vadd.f32 0.0, %v524
        %526 = vmatmul.f32.gmra.mxu0 %v436
        %v527 = vpop.f32.mrf.mxu0
        %v528 = vadd.f32 0.0, %v527
        %529 = vdwg.mxu0
        %530 = vmatpush.msra.mxu0 0.0
        %531 = vmatpush.msra.mxu0 0.0
        %532 = vmatpush.msra.mxu0 0.0
        %533 = vmatpush.msra.mxu0 0.0
        %534 = vmatpush.msra.mxu0 0.0
        %535 = vmatpush.msra.mxu0 0.0
        %536 = vmatpush.msra.mxu0 0.0
        %537 = vmatpush.msra.mxu0 0.0
        %538 = vmatpush.msra.mxu0 0.0
        %539 = vmatpush.msra.mxu0 0.0
        %540 = vmatpush.msra.mxu0 0.0
        %541 = vmatpush.msra.mxu0 0.0
        %542 = vmatpush.msra.mxu0 0.0
        %543 = vmatpush.msra.mxu0 0.0
        %544 = vmatpush.msra.mxu0 %v400
        %545 = vmatpush.msra.mxu0 %v397
        %546 = vmatmul.f32.gmra.mxu0 %v433
        %v547 = vpop.f32.mrf.mxu0
        %v548 = vadd.f32 0.0, %v547
        %549 = vmatmul.f32.gmra.mxu0 %v436
        %v550 = vpop.f32.mrf.mxu0
        %v551 = vadd.f32 0.0, %v550
        %552 = vdwg.mxu0
        %553 = vmatpush.msra.mxu0 0.0
        %554 = vmatpush.msra.mxu0 0.0
        %555 = vmatpush.msra.mxu0 0.0
        %556 = vmatpush.msra.mxu0 0.0
        %557 = vmatpush.msra.mxu0 0.0
        %558 = vmatpush.msra.mxu0 0.0
        %559 = vmatpush.msra.mxu0 0.0
        %560 = vmatpush.msra.mxu0 0.0
        %561 = vmatpush.msra.mxu0 0.0
        %562 = vmatpush.msra.mxu0 0.0
        %563 = vmatpush.msra.mxu0 0.0
        %564 = vmatpush.msra.mxu0 0.0
        %565 = vmatpush.msra.mxu0 0.0
        %566 = vmatpush.msra.mxu0 0.0
        %567 = vmatpush.msra.mxu0 %v406
        %568 = vmatpush.msra.mxu0 %v403
        %569 = vmatmul.f32.gmra.mxu0 %v433
        %v570 = vpop.f32.mrf.mxu0
        %v571 = vadd.f32 0.0, %v570
        %572 = vmatmul.f32.gmra.mxu0 %v436
        %v573 = vpop.f32.mrf.mxu0
        %v574 = vadd.f32 0.0, %v573
        %575 = vdwg.mxu0
        %576 = vmatpush.msra.mxu0 0.0
        %577 = vmatpush.msra.mxu0 0.0
        %578 = vmatpush.msra.mxu0 0.0
        %579 = vmatpush.msra.mxu0 0.0
        %580 = vmatpush.msra.mxu0 0.0
        %581 = vmatpush.msra.mxu0 0.0
        %582 = vmatpush.msra.mxu0 0.0
        %583 = vmatpush.msra.mxu0 0.0
        %584 = vmatpush.msra.mxu0 0.0
        %585 = vmatpush.msra.mxu0 0.0
        %586 = vmatpush.msra.mxu0 0.0
        %587 = vmatpush.msra.mxu0 0.0
        %588 = vmatpush.msra.mxu0 0.0
        %589 = vmatpush.msra.mxu0 0.0
        %590 = vmatpush.msra.mxu0 %v412
        %591 = vmatpush.msra.mxu0 %v409
        %592 = vmatmul.f32.gmra.mxu0 %v433
        %v593 = vpop.f32.mrf.mxu0
        %v594 = vadd.f32 0.0, %v593
        %595 = vmatmul.f32.gmra.mxu0 %v436
        %v596 = vpop.f32.mrf.mxu0
        %v597 = vadd.f32 0.0, %v596
        %598 = vdwg.mxu0
        %599 = vmatpush.msra.mxu0 0.0
        %600 = vmatpush.msra.mxu0 0.0
        %601 = vmatpush.msra.mxu0 0.0
        %602 = vmatpush.msra.mxu0 0.0
        %603 = vmatpush.msra.mxu0 0.0
        %604 = vmatpush.msra.mxu0 0.0
        %605 = vmatpush.msra.mxu0 0.0
        %606 = vmatpush.msra.mxu0 0.0
        %607 = vmatpush.msra.mxu0 0.0
        %608 = vmatpush.msra.mxu0 0.0
        %609 = vmatpush.msra.mxu0 0.0
        %610 = vmatpush.msra.mxu0 0.0
        %611 = vmatpush.msra.mxu0 0.0
        %612 = vmatpush.msra.mxu0 0.0
        %613 = vmatpush.msra.mxu0 %v418
        %614 = vmatpush.msra.mxu0 %v415
        %615 = vmatmul.f32.gmra.mxu0 %v433
        %v616 = vpop.f32.mrf.mxu0
        %v617 = vadd.f32 0.0, %v616
        %618 = vmatmul.f32.gmra.mxu0 %v436
        %v619 = vpop.f32.mrf.mxu0
        %v620 = vadd.f32 0.0, %v619
        %621 = vdwg.mxu0
        %622 = vmatpush.msra.mxu0 0.0
        %623 = vmatpush.msra.mxu0 0.0
        %624 = vmatpush.msra.mxu0 0.0
        %625 = vmatpush.msra.mxu0 0.0
        %626 = vmatpush.msra.mxu0 0.0
        %627 = vmatpush.msra.mxu0 0.0
        %628 = vmatpush.msra.mxu0 0.0
        %629 = vmatpush.msra.mxu0 0.0
        %630 = vmatpush.msra.mxu0 0.0
        %631 = vmatpush.msra.mxu0 0.0
        %632 = vmatpush.msra.mxu0 0.0
        %633 = vmatpush.msra.mxu0 0.0
        %634 = vmatpush.msra.mxu0 0.0
        %635 = vmatpush.msra.mxu0 0.0
        %636 = vmatpush.msra.mxu0 %v424
        %637 = vmatpush.msra.mxu0 %v421
        %638 = vmatmul.f32.gmra.mxu0 %v433
        %v639 = vpop.f32.mrf.mxu0
        %v640 = vadd.f32 0.0, %v639
        %641 = vmatmul.f32.gmra.mxu0 %v436
        %v642 = vpop.f32.mrf.mxu0
        %v643 = vadd.f32 0.0, %v642
        %644 = vdwg.mxu0
        %645 = vmatpush.msra.mxu0 0.0
        %646 = vmatpush.msra.mxu0 0.0
        %647 = vmatpush.msra.mxu0 0.0
        %648 = vmatpush.msra.mxu0 0.0
        %649 = vmatpush.msra.mxu0 0.0
        %650 = vmatpush.msra.mxu0 0.0
        %651 = vmatpush.msra.mxu0 0.0
        %652 = vmatpush.msra.mxu0 0.0
        %653 = vmatpush.msra.mxu0 0.0
        %654 = vmatpush.msra.mxu0 0.0
        %655 = vmatpush.msra.mxu0 0.0
        %656 = vmatpush.msra.mxu0 0.0
        %657 = vmatpush.msra.mxu0 0.0
        %658 = vmatpush.msra.mxu0 0.0
        %659 = vmatpush.msra.mxu0 %v430
        %660 = vmatpush.msra.mxu0 %v427
        %661 = vmatmul.f32.gmra.mxu0 %v433
        %v662 = vpop.f32.mrf.mxu0
        %v663 = vadd.f32 0.0, %v662
        %664 = vmatmul.f32.gmra.mxu0 %v436
        %v665 = vpop.f32.mrf.mxu0
        %v666 = vadd.f32 0.0, %v665
        %667 = vdwg.mxu0
        %v668 = vmul.f32 %v456, %v502
        %v669 = vmul.f32 %v459, %v505
        %v670 = vmul.f32 %v479, %v525
        %v671 = vmul.f32 %v482, %v528
        %v672 = vmul.f32 %v668, 0.012345679
        %v673 = vmul.f32 %v669, 0.012345679
        %v674 = vmul.f32 %v670, 0.012345679
        %v675 = vmul.f32 %v671, 0.012345679
        %v676 = vsub.f32 %v640, %v672
        %v677 = vsub.f32 %v643, %v673
        %v678 = vsub.f32 %v663, %v674
        %v679 = vsub.f32 %v666, %v675
        %v680 = vmul.f32 %v456, %v456
        %v681 = vmul.f32 %v459, %v459
        %v682 = vmul.f32 %v479, %v479
        %v683 = vmul.f32 %v482, %v482
        %v684 = vmul.f32 %v680, 0.012345679
        %v685 = vmul.f32 %v681, 0.012345679
        %v686 = vmul.f32 %v682, 0.012345679
        %v687 = vmul.f32 %v683, 0.012345679
        %v688 = vsub.f32 %v548, %v684
        %v689 = vsub.f32 %v551, %v685
        %v690 = vsub.f32 %v571, %v686
        %v691 = vsub.f32 %v574, %v687
        %v692 = vmul.f32 %v502, %v502
        %v693 = vmul.f32 %v505, %v505
        %v694 = vmul.f32 %v525, %v525
        %v695 = vmul.f32 %v528, %v528
        %v696 = vmul.f32 %v692, 0.012345679
        %v697 = vmul.f32 %v693, 0.012345679
        %v698 = vmul.f32 %v694, 0.012345679
        %v699 = vmul.f32 %v695, 0.012345679
        %v700 = vsub.f32 %v594, %v696
        %v701 = vsub.f32 %v597, %v697
        %v702 = vsub.f32 %v617, %v698
        %v703 = vsub.f32 %v620, %v699
        %v704 = vmul.f32 %v676, %v676
        %v705 = vmul.f32 %v677, %v677
        %v706 = vmul.f32 %v678, %v678
        %v707 = vmul.f32 %v679, %v679
        %v708 = vmul.f32 %v688, %v700
        %v709 = vmul.f32 %v689, %v701
        %v710 = vmul.f32 %v690, %v702
        %v711 = vmul.f32 %v691, %v703
        %v712 = vadd.f32 %v708, 1e-05
        %v713 = vadd.f32 %v709, 1e-05
        %v714 = vadd.f32 %v710, 1e-05
        %v715 = vadd.f32 %v711, 1e-05
        %v716 = vrcp.pop %v712
        %v717 = vmul.f32 %v712, %v716
        %v718 = vsub.f32 1.0, %v717
        %v719 = vmul.f32 %v716, %v718
        %v720 = vadd.f32 %v716, %v719
        %vm721 = vweird.f32 %v712
        %vm722 = vweird.f32 %v716
        %vm723 = vmor %vm721, %vm722
        %v724 = vsel %vm723, %v716, %v720
        %v725 = vand.u32 2147483647, %v712
        %vm726 = vcmp.eq.f32.partialorder %v725, 8.507059e+37
        %v727 = vand.u32 %v712, 2147483648
        %v728 = vor.u32 1.1754944e-38, %v727
        %v729 = vsel %vm726, %v728, %v724
        %v730 = vmul.f32 %v704, %v729
        %v731 = vrcp.pop %v713
        %v732 = vmul.f32 %v713, %v731
        %v733 = vsub.f32 1.0, %v732
        %v734 = vmul.f32 %v731, %v733
        %v735 = vadd.f32 %v731, %v734
        %vm736 = vweird.f32 %v713
        %vm737 = vweird.f32 %v731
        %vm738 = vmor %vm736, %vm737
        %v739 = vsel %vm738, %v731, %v735
        %v740 = vand.u32 2147483647, %v713
        %vm741 = vcmp.eq.f32.partialorder %v740, 8.507059e+37
        %v742 = vand.u32 %v713, 2147483648
        %v743 = vor.u32 1.1754944e-38, %v742
        %v744 = vsel %vm741, %v743, %v739
        %v745 = vmul.f32 %v705, %v744
        %v746 = vrcp.pop %v714
        %v747 = vmul.f32 %v714, %v746
        %v748 = vsub.f32 1.0, %v747
        %v749 = vmul.f32 %v746, %v748
        %v750 = vadd.f32 %v746, %v749
        %vm751 = vweird.f32 %v714
        %vm752 = vweird.f32 %v746
        %vm753 = vmor %vm751, %vm752
        %v754 = vsel %vm753, %v746, %v750
        %v755 = vand.u32 2147483647, %v714
        %vm756 = vcmp.eq.f32.partialorder %v755, 8.507059e+37
        %v757 = vand.u32 %v714, 2147483648
        %v758 = vor.u32 1.1754944e-38, %v757
        %v759 = vsel %vm756, %v758, %v754
        %v760 = vmul.f32 %v706, %v759
        %v761 = vrcp.pop %v715
        %v762 = vmul.f32 %v715, %v761
        %v763 = vsub.f32 1.0, %v762
        %v764 = vmul.f32 %v761, %v763
        %v765 = vadd.f32 %v761, %v764
        %vm766 = vweird.f32 %v715
        %vm767 = vweird.f32 %v761
        %vm768 = vmor %vm766, %vm767
        %v769 = vsel %vm768, %v761, %v765
        %v770 = vand.u32 2147483647, %v715
        %vm771 = vcmp.eq.f32.partialorder %v770, 8.507059e+37
        %v772 = vand.u32 %v715, 2147483648
        %v773 = vor.u32 1.1754944e-38, %v772
        %v774 = vsel %vm771, %v773, %v769
        %v775 = vmul.f32 %v707, %v774
        %v776 = vld [vmem:[#allocation2] sm:$0xff]
        %v777 = vld [vmem:[#allocation2 + $0x8] sm:$0xff]
        %v778 = vld [vmem:[#allocation2 + $0x10] sm:$0xff]
        %v779 = vld [vmem:[#allocation2 + $0x18] sm:$0xff]
        %v780 = vadd.f32 %v776, %v730
        %v781 = vadd.f32 %v777, %v745
        %v782 = vadd.f32 %v778, %v760
        %v783 = vadd.f32 %v779, %v775
        %784 = vst.msk [vmem:[#allocation2] sm:$0xff] %vm294, %v780
        %785 = vst.msk [vmem:[#allocation2 + $0x8] sm:$0xff] %vm294, %v781
        %786 = vst.msk [vmem:[#allocation2 + $0x10] sm:$0xff] %vm294, %v782
        %787 = vst.msk [vmem:[#allocation2 + $0x18] sm:$0xff] %vm294, %v783
        %p788 = scmp.eq.s32.totalorder %s27, 1
        // Predicated region
        $region41: #{tpu_custom_call.1} parent=27 // pred_check
          %p789 = pneg %p788
        $region42: #{tpu_custom_call.1} parent=27 // pred_check_branch
          %791 = sbr.rel (%p789) target = $region44
        $region43: #{tpu_custom_call.1} parent=27 // pred_region
          %v792 = vld [vmem:[#allocation2] sm:$0xff]
          %v793 = vld [vmem:[#allocation2 + $0x8] sm:$0xff]
          %v794 = vld [vmem:[#allocation2 + $0x10] sm:$0xff]
          %v795 = vld [vmem:[#allocation2 + $0x18] sm:$0xff]
          %v796 = vsel %vm294, %v792, 0.0
          %v797 = vsel %vm294, %v793, 0.0
          %v798 = vadd.f32 %v796, %v797
          %v799 = vsel %vm294, %v794, 0.0
          %v800 = vadd.f32 %v798, %v799
          %v801 = vsel %vm294, %v795, 0.0
          %v802 = vadd.f32 %v800, %v801
          %803 = vadd.xlane.f32.xlu0 %v802
          %v804 = vpop.xlane.xlu0 %803
          %v805 = vrot.slane %v804, 4
          %v806 = vadd.f32 %v804, %v805
          %v807 = vrot.slane %v806, 2
          %v808 = vadd.f32 %v806, %v807
          %v809 = vrot.slane %v808, 1
          %v810 = vadd.f32 %v808, %v809
          %s811 = vtos %v810
          %v812 = vstv %s811
          %813 = vst [vmem:[%s231] sm:$0xff] %v812
        $region44: #{tpu_custom_call.1} parent=27 // pred_fallthru
          _
        %s814 = sand.u32 %s102, 1
        %s815 = scalar_lea.sflag [#allocation7], %s814
        %s816 = sand.u32 %s102, 1
        %s817 = smul.addr %s816, 8
        %s818 = scalar_lea.vmem [#allocation10], %s817
        // Predicated region
        $region45: #{tpu_custom_call.1} parent=27 // pred_check
          %p819 = pneg %p112
        $region46: #{tpu_custom_call.1} parent=27 // pred_check_branch
          %821 = sbr.rel (%p819) target = $region48
        $region47: #{tpu_custom_call.1} parent=27 // pred_region
          %823 = vsyncadd %s815, 0
          %s824 = smul.addr %s26, 8
          %s825 = scalar_lea.hbm %s2, %s824
          %s827 = sshll.u32 %s818, 4
          %s828 = int_to_ptr.vmem [resolvable:$true] %s827
          %s829 = sshll.u32 %s825, 4
          %s830 = int_to_ptr.hbm [resolvable:$true] %s829
          %832 = dma.vmem_to_hbm [thread:$0]  %s828, 128, %s830, %s815
        $region48: #{tpu_custom_call.1} parent=27 // pred_fallthru
          _
      $region28: #{tpu_custom_call.1} parent=5 // pred_fallthru
        _
      %p833 = scmp.le.s32.totalorder 2, %s17
      // Predicated region
      $region49: #{tpu_custom_call.1} parent=5 // pred_check
        %p834 = pneg %p833
      $region50: #{tpu_custom_call.1} parent=5 // pred_check_branch
        %836 = sbr.rel (%p834) target = $region52
      $region51: #{tpu_custom_call.1} parent=5 // pred_region
        %s837 = ssub.s32 %s17, 2
        // Predicated region
        $region53: #{tpu_custom_call.1} parent=51 // pred_check
          %p838 = pneg %p118
        $region54: #{tpu_custom_call.1} parent=51 // pred_check_branch
          %840 = sbr.rel (%p838) target = $region56
        $region55: #{tpu_custom_call.1} parent=51 // pred_region
          %s841 = sand.u32 %s103, 1
          %s842 = scalar_lea.sflag [#allocation7], %s841
          %s843 = sand.u32 %s103, 1
          %s844 = smul.addr %s843, 8
          %s845 = scalar_lea.vmem [#allocation10], %s844
          %847 = dma.done %s842, 128
        $region56: #{tpu_custom_call.1} parent=51 // pred_fallthru
          _
      $region52: #{tpu_custom_call.1} parent=5 // pred_fallthru
        _
    $region6: #{tpu_custom_call.1} parent=1 // loop_footer
      %s21 = sadd.s32 1, %s17
    $region7: #{tpu_custom_call.1} parent=1 // loop_footer_branch
      %16 = sbr.rel target = $region3
    $region8: #{tpu_custom_call.1} parent=1 // loop_exit
      _
    %848 = vsyncpa [#allocation6], 1
    %s849 = scalar_lea.sflag [#allocation6], 1
    %850 = vsyncpa %s849, 1
    %851 = vsyncpa [#allocation9], 1
    %s852 = scalar_lea.sflag [#allocation9], 1
    %853 = vsyncpa %s852, 1
    %854 = vsyncpa [#allocation7], 1
    %s855 = scalar_lea.sflag [#allocation7], 1
    %856 = vsyncpa %s855, 1

</llo_original>
